<compile_context>
chip_gen: v5e
topology: v5e:2x2
jax: 0.10.0
libtpu: 0.0.40
codegen_flags: <defaults>
</compile_context>

<pallas_src>
import math
import functools

import jax
import jax.numpy as jnp
from jax.experimental import pallas as pl
from jax.experimental.pallas import tpu as pltpu

IN_DIM = 128
HID_DIM = 64
OUT_DIM = 1


def _round_up(n, m):
    return ((n + m - 1) // m) * m


def _cdiv(a, b):
    return (a + b - 1) // b


def _default_mxu_bf16():
    """Enable the in-kernel bf16 MXU path on v7x by default."""
    try:
        kind = jax.devices()[0].device_kind.lower()
    except Exception:
        return False
    return ("v7" in kind) or ("7x" in kind)


def valuenet_kernel(x_ref, w1_ref, b1_ref, w2_ref, b2_ref, o_ref, *, mxu_bf16):
    # x_ref: (TB, 128); w1_ref: (128, 64); b1_ref: (1, 64); w2_ref: (64, 1);
    # b2_ref: (1, 1) in SMEM; o_ref: (TB, 1).
    x = x_ref[...]
    w1 = w1_ref[...]
    if mxu_bf16:
        # Single-pass bf16 MXU matmul with f32 accumulation. On v7x the
        # multi-pass f32 matmul would exceed the x DMA time and flip the
        # kernel to MXU-bound; the cast is cheap VPU work on VMEM-resident data.
        x = x.astype(jnp.bfloat16)
        w1 = w1.astype(jnp.bfloat16)
    h = jnp.dot(x, w1, preferred_element_type=jnp.float32)            # (TB, 64)
    h = jnp.maximum(h + b1_ref[...], 0.0)                             # ReLU
    y = jnp.dot(h, w2_ref[...], preferred_element_type=jnp.float32)   # (TB, 1)
    o_ref[...] = (y + b2_ref[0, 0]).astype(o_ref.dtype)


@functools.partial(jax.jit, static_argnames=("tb", "mxu_bf16"))
def value_net_forward(x, w1, b1, w2, b2, *, tb=8192, mxu_bf16=None):
    """x: (B, 128) -> (B, 1) f32.

    Weights stored as (in, out): w1 (128,64), b1 (1,64), w2 (64,1), b2 (1,1),
    i.e. the kernel computes x @ W + b (== PyTorch x @ W.T + b).
    `tb` caps the batch tile; `mxu_bf16=None` auto-enables bf16 MXU on v7x.
    """
    B = x.shape[0]
    if mxu_bf16 is None:
        mxu_bf16 = _default_mxu_bf16()

    # Batch tile: multiple of 128 when possible (clean (8,128) alignment and
    # unmasked stores), capped at `tb`, and sized so a large B still yields
    # >= ~4 grid steps for DMA/compute overlap and megacore sharding.
    if B < 128:
        TB = _round_up(max(B, 8), 8)
    else:
        TB = max(128, min(tb, _round_up(_cdiv(B, 4), 128)))
    grid = _cdiv(B, TB)   # partial tail block allowed; tail rows are discarded

    out = pl.pallas_call(
        functools.partial(valuenet_kernel, mxu_bf16=mxu_bf16),
        out_shape=jax.ShapeDtypeStruct((B, OUT_DIM), jnp.float32),
        grid=(grid,),
        in_specs=[
            pl.BlockSpec((TB, IN_DIM), lambda i: (i, 0)),        # x: batch-tiled
            pl.BlockSpec((IN_DIM, HID_DIM), lambda i: (0, 0)),   # w1: resident
            pl.BlockSpec((1, HID_DIM), lambda i: (0, 0)),        # b1: resident
            pl.BlockSpec((HID_DIM, OUT_DIM), lambda i: (0, 0)),  # w2: resident
            pl.BlockSpec(memory_space=pltpu.MemorySpace.SMEM),   # b2 scalar
        ],
        out_specs=pl.BlockSpec((TB, OUT_DIM), lambda i: (i, 0)),
        compiler_params=pltpu.CompilerParams(
            dimension_semantics=("parallel",),       # shard tiles over TCs (v7x)
            vmem_limit_bytes=32 * 1024 * 1024),      # headroom for 8 MiB x stream
    )(x, w1, b1, w2, b2)

    return out


def init_params(key):
    """Deterministic init mimicking PyTorch Linear default U(-1/sqrt(fan_in), +)."""
    k1, k2, k3, k4 = jax.random.split(key, 4)
    bound1 = 1.0 / math.sqrt(IN_DIM)
    bound2 = 1.0 / math.sqrt(HID_DIM)
    w1 = jax.random.uniform(k1, (IN_DIM, HID_DIM), jnp.float32, -bound1, bound1)
    b1 = jax.random.uniform(k2, (1, HID_DIM), jnp.float32, -bound1, bound1)
    w2 = jax.random.uniform(k3, (HID_DIM, OUT_DIM), jnp.float32, -bound2, bound2)
    b2 = jax.random.uniform(k4, (1, OUT_DIM), jnp.float32, -bound2, bound2)
    return w1, b1, w2, b2


def reference_forward(x, w1, b1, w2, b2):
    h = jnp.maximum(x @ w1 + b1, 0.0)
    return h @ w2 + b2


if __name__ == "__main__":
    key = jax.random.PRNGKey(0)
    kx, kp = jax.random.split(key)
    w1, b1, w2, b2 = init_params(kp)

    # 1) Small single-tile case, exact f32 MXU path (tight tolerance).
    B = 8
    x = jax.random.normal(kx, (B, IN_DIM), jnp.float32)
    out = jax.block_until_ready(value_net_forward(x, w1, b1, w2, b2, mxu_bf16=False))
    ref = reference_forward(x, w1, b1, w2, b2)
    assert out.shape == (B, OUT_DIM)
    assert jnp.allclose(out, ref, atol=1e-4, rtol=1e-4), "mismatch vs reference (B=8)"

    # 2) Ragged multi-tile case: B=200, TB=128 -> 2 grid steps, 72-row partial tail.
    B2 = 200
    x2 = jax.random.normal(jax.random.PRNGKey(1), (B2, IN_DIM), jnp.float32)
    out2 = jax.block_until_ready(
        value_net_forward(x2, w1, b1, w2, b2, tb=128, mxu_bf16=False))
    ref2 = reference_forward(x2, w1, b1, w2, b2)
    assert out2.shape == (B2, OUT_DIM)
    assert jnp.allclose(out2, ref2, atol=1e-4, rtol=1e-4), "mismatch vs reference (B=200)"

    # 3) Larger batch exercising the >=4-step tile heuristic (TB=256, grid=4).
    B3 = 1024
    x3 = jax.random.normal(jax.random.PRNGKey(2), (B3, IN_DIM), jnp.float32)
    out3 = jax.block_until_ready(value_net_forward(x3, w1, b1, w2, b2, mxu_bf16=False))
    ref3 = reference_forward(x3, w1, b1, w2, b2)
    assert jnp.allclose(out3, ref3, atol=1e-4, rtol=1e-4), "mismatch vs reference (B=1024)"

    # 4) In-kernel bf16 MXU path (v7x default); loose tolerance.
    out4 = jax.block_until_ready(
        value_net_forward(x2, w1, b1, w2, b2, tb=128, mxu_bf16=True))
    assert jnp.allclose(out4, ref2, atol=5e-2, rtol=5e-2), "bf16 MXU path mismatch"

    # 5) Default (auto-detected) path: just verify it runs and is finite.
    out5 = jax.block_until_ready(value_net_forward(x2, w1, b1, w2, b2))
    assert out5.shape == (B2, OUT_DIM)
    assert bool(jnp.all(jnp.isfinite(out5)))

    print("KERNEL_OK")
</pallas_src>

<mosaic_0001>
module attributes {stable_mosaic.version = 11 : i64} {
  func.func @valuenet_kernel(%arg0: i32, %arg1: memref<8x128xf32, #tpu.memory_space<vmem>>, %arg2: memref<128x64xf32, #tpu.memory_space<vmem>>, %arg3: memref<1x64xf32, #tpu.memory_space<vmem>>, %arg4: memref<64x1xf32, #tpu.memory_space<vmem>>, %arg5: memref<1x1xf32, #tpu.memory_space<smem>>, %arg6: memref<8x1xf32, #tpu.memory_space<vmem>>) attributes {dimension_semantics = [#tpu.dimension_semantics<parallel>], iteration_bounds = array<i64: 1>, scalar_prefetch = 0 : i64, scratch_operands = 0 : i64, tpu.core_type = #tpu.core_type<tc>, window_params = [{transform_indices = @transform_0, window_bounds = array<i64: 8, 128>}, {pipeline_mode = #tpu.pipeline_mode<synchronous>, transform_indices = @transform_1, window_bounds = array<i64: 128, 64>}, {pipeline_mode = #tpu.pipeline_mode<synchronous>, transform_indices = @transform_2, window_bounds = array<i64: 1, 64>}, {pipeline_mode = #tpu.pipeline_mode<synchronous>, transform_indices = @transform_3, window_bounds = array<i64: 64, 1>}, {transform_indices = @transform_4, window_bounds = array<i64: 1, 1>}, {transform_indices = @transform_5, window_bounds = array<i64: 8, 1>}]} {
    %c0 = arith.constant 0 : index
    %c0_0 = arith.constant 0 : index
    %0 = vector.load %arg1[%c0, %c0_0] : memref<8x128xf32, #tpu.memory_space<vmem>>, vector<8x128xf32>
    %c0_1 = arith.constant 0 : index
    %c0_2 = arith.constant 0 : index
    %1 = vector.load %arg2[%c0_1, %c0_2] : memref<128x64xf32, #tpu.memory_space<vmem>>, vector<128x64xf32>
    %cst = arith.constant dense<0.000000e+00> : vector<8x64xf32>
    %2 = tpu.matmul %0, %1, %cst {dimension_numbers = #tpu.dot_dimension_numbers<[1], [0], [0], [1], [0, 0, 1, 1], [], []>} : vector<8x128xf32>, vector<128x64xf32>, vector<8x64xf32> -> vector<8x64xf32>
    %c0_3 = arith.constant 0 : index
    %c0_4 = arith.constant 0 : index
    %3 = vector.load %arg3[%c0_3, %c0_4] : memref<1x64xf32, #tpu.memory_space<vmem>>, vector<1x64xf32>
    %4 = vector.broadcast %3 : vector<1x64xf32> to vector<8x64xf32>
    %5 = arith.addf %2, %4 : vector<8x64xf32>
    %cst_5 = arith.constant 0.000000e+00 : f32
    %6 = vector.broadcast %cst_5 : f32 to vector<8x64xf32>
    %7 = arith.maximumf %5, %6 : vector<8x64xf32>
    %c0_6 = arith.constant 0 : index
    %c0_7 = arith.constant 0 : index
    %8 = vector.load %arg4[%c0_6, %c0_7] : memref<64x1xf32, #tpu.memory_space<vmem>>, vector<64x1xf32>
    %cst_8 = arith.constant dense<0.000000e+00> : vector<8x1xf32>
    %9 = tpu.matmul %7, %8, %cst_8 {dimension_numbers = #tpu.dot_dimension_numbers<[1], [0], [0], [1], [0, 0, 1, 1], [], []>} : vector<8x64xf32>, vector<64x1xf32>, vector<8x1xf32> -> vector<8x1xf32>
    %c0_9 = arith.constant 0 : index
    %c0_10 = arith.constant 0 : index
    %10 = memref.load %arg5[%c0_9, %c0_10] : memref<1x1xf32, #tpu.memory_space<smem>>
    %11 = vector.broadcast %10 : f32 to vector<8x1xf32>
    %12 = arith.addf %9, %11 : vector<8x1xf32>
    %c0_11 = arith.constant 0 : index
    %c0_12 = arith.constant 0 : index
    %13 = vector.load %arg6[%c0_11, %c0_12] : memref<8x1xf32, #tpu.memory_space<vmem>>, vector<8x1xf32>
    tpu.vector_store %arg6[%c0_11, %c0_12], %12 {strides = array<i32>} : memref<8x1xf32, #tpu.memory_space<vmem>>, vector<8x1xf32>,
    return
  }
  func.func @transform_0(%arg0: i32) -> (i32, i32) {
    %c0_i32 = arith.constant 0 : i32
    %c0_i32_0 = arith.constant 0 : i32
    return %arg0, %c0_i32 : i32, i32
  }
  func.func @transform_1(%arg0: i32) -> (i32, i32) {
    %c0_i32 = arith.constant 0 : i32
    %c0_i32_0 = arith.constant 0 : i32
    %c0_i32_1 = arith.constant 0 : i32
    return %c0_i32, %c0_i32_0 : i32, i32
  }
  func.func @transform_2(%arg0: i32) -> (i32, i32) {
    %c0_i32 = arith.constant 0 : i32
    %c0_i32_0 = arith.constant 0 : i32
    %c0_i32_1 = arith.constant 0 : i32
    return %c0_i32, %c0_i32_0 : i32, i32
  }
  func.func @transform_3(%arg0: i32) -> (i32, i32) {
    %c0_i32 = arith.constant 0 : i32
    %c0_i32_0 = arith.constant 0 : i32
    %c0_i32_1 = arith.constant 0 : i32
    return %c0_i32, %c0_i32_0 : i32, i32
  }
  func.func @transform_4(%arg0: i32) -> (i32, i32) {
    %c0_i32 = arith.constant 0 : i32
    %c0_i32_0 = arith.constant 0 : i32
    %c0_i32_1 = arith.constant 0 : i32
    return %c0_i32, %c0_i32_0 : i32, i32
  }
  func.func @transform_5(%arg0: i32) -> (i32, i32) {
    %c0_i32 = arith.constant 0 : i32
    %c0_i32_0 = arith.constant 0 : i32
    return %arg0, %c0_i32 : i32, i32
  }
}

</mosaic_0001>

<llo_original>
// kernel: value_net_forward.1
$region0: #{value_net_forward.1}
  #allocation0 [shape = 'u32[]', space=smem, size = 0x4, offset = 0x4, fixed_abs, tag = 'smem constant byte address 0x4 - core index']
  #allocation1 [shape = 'u32[72,128]{1,0:T(1,128)}', space=vmem, size = 0x9000, scoped, tag = 'internal scratch']
  #allocation2 [shape = 'f32[1,1]{1,0:T(1,128)S(6)}', space=smem, size = 0x200, scoped, tag = 'scoped memory for value_net_forward.1']
  %s0 = inlined_call_operand.vmem [shape: f32[8,128], index: 0, kind: input, shape index: {}]
  %s1 = inlined_call_operand.vmem [shape: f32[128,64], index: 1, kind: input, shape index: {}]
  %s2 = inlined_call_operand.vmem [shape: f32[1,64], index: 2, kind: input, shape index: {}]
  %s3 = inlined_call_operand.vmem [shape: f32[64,1], index: 3, kind: input, shape index: {}]
  %s4 = inlined_call_operand.<no memory space> [shape: f32[1,1], index: 4, kind: input, shape index: {}]
  %s5 = inlined_call_operand.vmem [shape: f32[8,1], index: 5, kind: output, shape index: {}]
  %s6 = sld [smem:[#allocation0]]
  $region30: #{value_net_forward.1} parent=0
    _
  %s8 = ssub.s32 1, %s6
  %s9 = scalar_select 0, %s8, %s6
  %10 = sst [smem:[#allocation2]] %s4
  // Predicated region
  $region2: #{value_net_forward.1} parent=0 // pred_check
    _
  $region3: #{value_net_forward.1} parent=0 // pred_check_branch
    %12 = sbr.rel (0) target = $region5
  $region4: #{value_net_forward.1} parent=0 // pred_region
    _
  $region5: #{value_net_forward.1} parent=0 // pred_fallthru
    _
  // Predicated region
  $region6: #{value_net_forward.1} parent=0 // pred_check
    _
  $region7: #{value_net_forward.1} parent=0 // pred_check_branch
    %14 = sbr.rel (0) target = $region9
  $region8: #{value_net_forward.1} parent=0 // pred_region
    _
  $region9: #{value_net_forward.1} parent=0 // pred_fallthru
    _
  // Predicated region
  $region10: #{value_net_forward.1} parent=0 // pred_check
    _
  $region11: #{value_net_forward.1} parent=0 // pred_check_branch
    %16 = sbr.rel (0) target = $region13
  $region12: #{value_net_forward.1} parent=0 // pred_region
    _
  $region13: #{value_net_forward.1} parent=0 // pred_fallthru
    _
  // Predicated region
  $region14: #{value_net_forward.1} parent=0 // pred_check
    _
  $region15: #{value_net_forward.1} parent=0 // pred_check_branch
    %18 = sbr.rel (0) target = $region17
  $region16: #{value_net_forward.1} parent=0 // pred_region
    _
  $region17: #{value_net_forward.1} parent=0 // pred_fallthru
    _
  // Predicated region
  $region18: #{value_net_forward.1} parent=0 // pred_check
    _
  $region19: #{value_net_forward.1} parent=0 // pred_check_branch
    %20 = sbr.rel (0) target = $region21
  $region20: #{value_net_forward.1} parent=0 // pred_region
    _
  $region21: #{value_net_forward.1} parent=0 // pred_fallthru
    _
  %v21 = vld [vmem:[%s0] sm:$0xff]
  %v22 = vld [vmem:[%s1] sm:$0xff]
  %v23 = vld [vmem:[%s1 + $0x8] sm:$0xff]
  %v24 = vld [vmem:[%s1 + $0x10] sm:$0xff]
  %v25 = vld [vmem:[%s1 + $0x18] sm:$0xff]
  %v26 = vld [vmem:[%s1 + $0x20] sm:$0xff]
  %v27 = vld [vmem:[%s1 + $0x28] sm:$0xff]
  %v28 = vld [vmem:[%s1 + $0x30] sm:$0xff]
  %v29 = vld [vmem:[%s1 + $0x38] sm:$0xff]
  %v30 = vld [vmem:[%s1 + $0x40] sm:$0xff]
  %v31 = vld [vmem:[%s1 + $0x48] sm:$0xff]
  %v32 = vld [vmem:[%s1 + $0x50] sm:$0xff]
  %v33 = vld [vmem:[%s1 + $0x58] sm:$0xff]
  %v34 = vld [vmem:[%s1 + $0x60] sm:$0xff]
  %v35 = vld [vmem:[%s1 + $0x68] sm:$0xff]
  %v36 = vld [vmem:[%s1 + $0x70] sm:$0xff]
  %v37 = vld [vmem:[%s1 + $0x78] sm:$0xff]
  %v38 = vld [vmem:[%s2] sm:$0x1]
  %v40 = vperm.slane %v38, 0
  %42 = vmatpush.msra.mxu0 %v37
  %43 = vmatpush.msra.mxu0 %v36
  %44 = vmatpush.msra.mxu0 %v35
  %45 = vmatpush.msra.mxu0 %v34
  %46 = vmatpush.msra.mxu0 %v33
  %47 = vmatpush.msra.mxu0 %v32
  %48 = vmatpush.msra.mxu0 %v31
  %49 = vmatpush.msra.mxu0 %v30
  %50 = vmatpush.msra.mxu0 %v29
  %51 = vmatpush.msra.mxu0 %v28
  %52 = vmatpush.msra.mxu0 %v27
  %53 = vmatpush.msra.mxu0 %v26
  %54 = vmatpush.msra.mxu0 %v25
  %55 = vmatpush.msra.mxu0 %v24
  %56 = vmatpush.msra.mxu0 %v23
  %57 = vmatpush.msra.mxu0 %v22
  %58 = vmatmul.f32.gmra.mxu0 %v21
  %v59 = vpop.f32.mrf.mxu0
  %v60 = vadd.f32 %v40, %v59
  %61 = vdwg.mxu0
  %v62 = vmax.f32 %v60, 0.0
  %v63 = vld [vmem:[%s3] sm:$0xff]
  %v64 = vld [vmem:[%s3 + $0x8] sm:$0xff]
  %v65 = vld [vmem:[%s3 + $0x10] sm:$0xff]
  %v66 = vld [vmem:[%s3 + $0x18] sm:$0xff]
  %v67 = vld [vmem:[%s3 + $0x20] sm:$0xff]
  %v68 = vld [vmem:[%s3 + $0x28] sm:$0xff]
  %v69 = vld [vmem:[%s3 + $0x30] sm:$0xff]
  %v70 = vld [vmem:[%s3 + $0x38] sm:$0xff]
  %s71 = sld [smem:[#allocation2]]
  %v72 = vstv %s71
  %vm73 = vcmask 523264
  %v75 = vsel %vm73, %v62, 0
  %77 = vmatpush.msra.mxu0 0.0
  %78 = vmatpush.msra.mxu0 0.0
  %79 = vmatpush.msra.mxu0 0.0
  %80 = vmatpush.msra.mxu0 0.0
  %81 = vmatpush.msra.mxu0 0.0
  %82 = vmatpush.msra.mxu0 0.0
  %83 = vmatpush.msra.mxu0 0.0
  %84 = vmatpush.msra.mxu0 0.0
  %85 = vmatpush.msra.mxu0 %v70
  %86 = vmatpush.msra.mxu0 %v69
  %87 = vmatpush.msra.mxu0 %v68
  %88 = vmatpush.msra.mxu0 %v67
  %89 = vmatpush.msra.mxu0 %v66
  %90 = vmatpush.msra.mxu0 %v65
  %91 = vmatpush.msra.mxu0 %v64
  %92 = vmatpush.msra.mxu0 %v63
  %93 = vmatmul.f32.gmra.mxu0 %v75
  %v94 = vpop.f32.mrf.mxu0
  %v95 = vadd.f32 %v72, %v94
  %96 = vdwg.mxu0
  %vm97 = vcmask 7168
  %98 = vst.msk [vmem:[%s5] sm:$0xff] %vm97, %v95
  // Predicated region
  $region22: #{value_net_forward.1} parent=0 // pred_check
    _
  $region23: #{value_net_forward.1} parent=0 // pred_check_branch
    %100 = sbr.rel (0) target = $region25
  $region24: #{value_net_forward.1} parent=0 // pred_region
    _
  $region25: #{value_net_forward.1} parent=0 // pred_fallthru
    _
  // Predicated region
  $region26: #{value_net_forward.1} parent=0 // pred_check
    _
  $region27: #{value_net_forward.1} parent=0 // pred_check_branch
    %102 = sbr.rel (0) target = $region29
  $region28: #{value_net_forward.1} parent=0 // pred_region
    _
  $region29: #{value_net_forward.1} parent=0 // pred_fallthru
    _

</llo_original>
